<compile_context>
chip_gen: v5e
topology: v5e:2x2
jax: 0.10.0
libtpu: 0.0.40
codegen_flags: <defaults>
</compile_context>

<pallas_src>
import jax
import jax.numpy as jnp
from jax import lax
from jax.experimental import pallas as pl
from jax.experimental.pallas import tpu as pltpu


_RC = 256                  # rows per inner compute chunk (2 lane-tiles wide)
_X_TILE_BYTES = 8 << 20    # target bytes per (single) x tile buffer
_MAX_TB = 1 << 18


def mlp_kernel(x_ref, w1_ref, b1_ref, w2_ref, b2_ref, o_ref):
    # x_ref: (TB, F)      o_ref: (1, TB//RC, RC)  lane-dense
    _, n_chunks, rc = o_ref.shape
    w1 = w1_ref[...]           # (F, 10)  resident across grid steps
    b1 = b1_ref[...]           # (1, 10)
    w2 = w2_ref[...]           # (1, 10)  fc2 weights as a row
    b2 = b2_ref[0, 0]          # scalar from SMEM

    def chunk(c, carry):
        r = pl.multiple_of(c * rc, rc)
        xc = x_ref[pl.ds(r, rc), :]                                  # (rc, F)
        # fc1 on the MXU with explicit f32 accumulation.
        h = jnp.dot(xc, w1, preferred_element_type=jnp.float32)      # (rc, 10)
        # bias + ReLU on the VPU.
        h = jnp.maximum(h + b1, 0.0)
        # fc2 as broadcast-mul + lane reduce (VPU/XLU); result is (rc,),
        # stored as one lane-dense row of the output block.
        y = jnp.sum(h * w2, axis=-1) + b2
        o_ref[0, c, :] = y.astype(o_ref.dtype)
        return carry

    lax.fori_loop(0, n_chunks, chunk, 0)


def _round_up(n, m):
    return ((n + m - 1) // m) * m


def _pick_tb(batch, features):
    """Rows per grid step: big enough to amortize per-step overhead (~multi-MiB
    x tiles), a multiple of _RC (or of 8 for tiny batches), and capped so
    batches larger than one chunk still get >= 2 grid steps (v7x megacore)."""
    tb = (_X_TILE_BYTES // (features * 4)) // _RC * _RC
    tb = min(max(tb, 8), _MAX_TB)
    if batch > _RC:
        tb = min(tb, _round_up(pl.cdiv(batch, 2), _RC))   # >= 2 grid steps
        tb = min(tb, _round_up(batch, _RC))
    else:
        tb = min(tb, _round_up(batch, 8))
    return tb


def _vmem_limit_bytes(tb, features, hidden, rc):
    """Budget the actual in-flight buffers (double-buffered x/out tiles,
    weights, lane-padded per-chunk temps) plus margin; clamp to a range that is
    safe on v5e/v6e (128 MiB physical) and v7x (64 MiB physical)."""
    x_bufs = 2 * tb * features * 4
    out_bufs = 2 * tb * 4
    w_bufs = 2 * (features * hidden + 2 * hidden) * 4
    chunk_tmp = 4 * rc * 128 * 4
    need = x_bufs + out_bufs + w_bufs + chunk_tmp + (8 << 20)
    return int(min(max(need, 32 << 20), 48 << 20))


def regression_model_forward(x, w1, b1, w2, b2):
    """Pallas equivalent of RegressionModel.forward.

    x:  (B, input_size) float32
    w1: (input_size, 10), b1: (1, 10)
    w2: (10, 1),          b2: (1, 1)
    returns (B, 1) float32
    """
    B, F = x.shape
    hidden = w1.shape[1]

    tb = _pick_tb(B, F)
    rc = min(_RC, tb)
    cpt = tb // rc               # chunks per tile (tb % rc == 0 by construction)
    nb = pl.cdiv(B, tb)          # ragged last tile handled by partial-block padding

    w2_row = w2.reshape(1, hidden)   # (1, 10) row for the VPU reduce
    b2_sc = b2.reshape(1, 1)         # scalar -> SMEM

    out = pl.pallas_call(
        mlp_kernel,
        out_shape=jax.ShapeDtypeStruct((nb, cpt, rc), jnp.float32),
        grid_spec=pltpu.PrefetchScalarGridSpec(
            num_scalar_prefetch=0,
            grid=(nb,),
            in_specs=[
                # x streamed over the batch axis (double-buffered DMA, big tiles).
                pl.BlockSpec((tb, F), lambda i: (i, 0)),
                # Weights/biases: constant index_map -> DMA'd once, stay resident.
                pl.BlockSpec((F, hidden), lambda i: (0, 0)),
                pl.BlockSpec((1, hidden), lambda i: (0, 0)),
                pl.BlockSpec((1, hidden), lambda i: (0, 0)),
                # b2 scalar lives in SMEM.
                pl.BlockSpec(memory_space=pltpu.MemorySpace.SMEM),
            ],
            # Lane-dense output block: (chunks_per_tile, RC) rows per grid step.
            out_specs=pl.BlockSpec((1, cpt, rc), lambda i: (i, 0, 0)),
        ),
        compiler_params=pltpu.CompilerParams(
            dimension_semantics=("parallel",),
            vmem_limit_bytes=_vmem_limit_bytes(tb, F, hidden, rc),
        ),
    )(x, w1, b1, w2_row, b2_sc)

    return out.reshape(nb * tb, 1)[:B]
    # TODO(synk): if input_size grows beyond one VMEM tile, add a K grid axis
    # over F with an f32 accumulator scratch (init/finalize via pl.when,
    # "arbitrary" axis) and single-buffer the resident w1 block
    # (pipeline_mode=pl.Buffered(1)); deepen x buffering (pl.Buffered(3)) on
    # v7x if tiles must shrink to fit 64 MiB.


def init_params(key, input_size, hidden=10, out=1):
    """Deterministic init mimicking nn.Linear defaults (uniform +/- 1/sqrt(fan_in))."""
    k1, k2, k3, k4 = jax.random.split(key, 4)
    bound1 = 1.0 / jnp.sqrt(float(input_size))
    bound2 = 1.0 / jnp.sqrt(float(hidden))
    w1 = jax.random.uniform(k1, (input_size, hidden), jnp.float32, -bound1, bound1)
    b1 = jax.random.uniform(k2, (1, hidden), jnp.float32, -bound1, bound1)
    w2 = jax.random.uniform(k3, (hidden, out), jnp.float32, -bound2, bound2)
    b2 = jax.random.uniform(k4, (1, out), jnp.float32, -bound2, bound2)
    return w1, b1, w2, b2


if __name__ == "__main__":
    key = jax.random.PRNGKey(0)
    kx, kp, kx2 = jax.random.split(key, 3)

    input_size = 32
    w1, b1, w2, b2 = init_params(kp, input_size)

    def ref_fn(x):
        return jnp.maximum(x @ w1 + b1, 0.0) @ w2 + b2

    # Small tile-aligned batch.
    x_small = jax.random.normal(kx, (8, input_size), jnp.float32)
    out_small = jax.block_until_ready(regression_model_forward(x_small, w1, b1, w2, b2))
    assert out_small.shape == (8, 1)
    assert jnp.allclose(out_small, ref_fn(x_small), atol=1e-5), "mismatch (aligned batch)"

    # Ragged batch: exercises the no-pad multi-tile path (grid=2, partial last tile).
    x_ragged = jax.random.normal(kx2, (300, input_size), jnp.float32)
    out_ragged = jax.block_until_ready(regression_model_forward(x_ragged, w1, b1, w2, b2))
    assert out_ragged.shape == (300, 1)
    assert jnp.allclose(out_ragged, ref_fn(x_ragged), atol=1e-5), "mismatch (ragged batch)"

    print("KERNEL_OK")
</pallas_src>

<mosaic_0001>
module attributes {stable_mosaic.version = 11 : i64} {
  func.func @mlp_kernel(%arg0: i32, %arg1: memref<8x32xf32, #tpu.memory_space<vmem>>, %arg2: memref<32x10xf32, #tpu.memory_space<vmem>>, %arg3: memref<1x10xf32, #tpu.memory_space<vmem>>, %arg4: memref<1x10xf32, #tpu.memory_space<vmem>>, %arg5: memref<1x1xf32, #tpu.memory_space<smem>>, %arg6: memref<1x1x8xf32, #tpu.memory_space<vmem>>) attributes {dimension_semantics = [#tpu.dimension_semantics<parallel>], iteration_bounds = array<i64: 1>, scalar_prefetch = 0 : i64, scratch_operands = 0 : i64, tpu.core_type = #tpu.core_type<tc>, window_params = [{transform_indices = @transform_0, window_bounds = array<i64: 8, 32>}, {pipeline_mode = #tpu.pipeline_mode<synchronous>, transform_indices = @transform_1, window_bounds = array<i64: 32, 10>}, {pipeline_mode = #tpu.pipeline_mode<synchronous>, transform_indices = @transform_2, window_bounds = array<i64: 1, 10>}, {pipeline_mode = #tpu.pipeline_mode<synchronous>, transform_indices = @transform_3, window_bounds = array<i64: 1, 10>}, {transform_indices = @transform_4, window_bounds = array<i64: 1, 1>}, {transform_indices = @transform_5, window_bounds = array<i64: 1, 1, 8>}]} {
    %c0 = arith.constant 0 : index
    %c0_0 = arith.constant 0 : index
    %0 = vector.load %arg2[%c0, %c0_0] : memref<32x10xf32, #tpu.memory_space<vmem>>, vector<32x10xf32>
    %c0_1 = arith.constant 0 : index
    %c0_2 = arith.constant 0 : index
    %1 = vector.load %arg3[%c0_1, %c0_2] : memref<1x10xf32, #tpu.memory_space<vmem>>, vector<1x10xf32>
    %c0_3 = arith.constant 0 : index
    %c0_4 = arith.constant 0 : index
    %2 = vector.load %arg4[%c0_3, %c0_4] : memref<1x10xf32, #tpu.memory_space<vmem>>, vector<1x10xf32>
    %c0_5 = arith.constant 0 : index
    %c0_6 = arith.constant 0 : index
    %3 = memref.load %arg5[%c0_5, %c0_6] : memref<1x1xf32, #tpu.memory_space<smem>>
    %c0_i32 = arith.constant 0 : i32
    %c8_i32 = arith.constant 8 : i32
    %4 = arith.muli %c0_i32, %c8_i32 : i32
    %5 = tpu.assume_multiple %4, 8 : i32
    %6 = arith.index_cast %5 : i32 to index
    %c0_7 = arith.constant 0 : index
    %7 = vector.load %arg1[%6, %c0_7] : memref<8x32xf32, #tpu.memory_space<vmem>>, vector<8x32xf32>
    %cst = arith.constant dense<0.000000e+00> : vector<8x10xf32>
    %8 = tpu.matmul %7, %0, %cst {dimension_numbers = #tpu.dot_dimension_numbers<[1], [0], [0], [1], [0, 0, 1, 1], [], []>} : vector<8x32xf32>, vector<32x10xf32>, vector<8x10xf32> -> vector<8x10xf32>
    %9 = vector.broadcast %1 : vector<1x10xf32> to vector<8x10xf32>
    %10 = arith.addf %8, %9 : vector<8x10xf32>
    %cst_8 = arith.constant 0.000000e+00 : f32
    %11 = vector.broadcast %cst_8 : f32 to vector<8x10xf32>
    %12 = arith.maximumf %10, %11 : vector<8x10xf32>
    %13 = vector.broadcast %2 : vector<1x10xf32> to vector<8x10xf32>
    %14 = arith.mulf %12, %13 : vector<8x10xf32>
    %cst_9 = arith.constant dense<0.000000e+00> : vector<8xf32>
    %15 = vector.multi_reduction <add>, %14, %cst_9 [1] : vector<8x10xf32> to vector<8xf32>
    %16 = vector.broadcast %3 : f32 to vector<8xf32>
    %17 = arith.addf %15, %16 : vector<8xf32>
    %c0_10 = arith.constant 0 : index
    %18 = arith.index_cast %c0_i32 : i32 to index
    %c0_11 = arith.constant 0 : index
    %19 = vector.load %arg6[%c0_10, %18, %c0_11] : memref<1x1x8xf32, #tpu.memory_space<vmem>>, vector<1x1x8xf32>
    %20 = vector.shape_cast %19 : vector<1x1x8xf32> to vector<8xf32>
    %21 = vector.shape_cast %17 : vector<8xf32> to vector<1x1x8xf32>
    tpu.vector_store %arg6[%c0_10, %18, %c0_11], %21 {strides = array<i32>} : memref<1x1x8xf32, #tpu.memory_space<vmem>>, vector<1x1x8xf32>,
    %c1_i32 = arith.constant 1 : i32
    return
  }
  func.func @transform_0(%arg0: i32) -> (i32, i32) {
    %c0_i32 = arith.constant 0 : i32
    %c0_i32_0 = arith.constant 0 : i32
    return %arg0, %c0_i32 : i32, i32
  }
  func.func @transform_1(%arg0: i32) -> (i32, i32) {
    %c0_i32 = arith.constant 0 : i32
    %c0_i32_0 = arith.constant 0 : i32
    %c0_i32_1 = arith.constant 0 : i32
    return %c0_i32, %c0_i32_0 : i32, i32
  }
  func.func @transform_2(%arg0: i32) -> (i32, i32) {
    %c0_i32 = arith.constant 0 : i32
    %c0_i32_0 = arith.constant 0 : i32
    %c0_i32_1 = arith.constant 0 : i32
    return %c0_i32, %c0_i32_0 : i32, i32
  }
  func.func @transform_3(%arg0: i32) -> (i32, i32) {
    %c0_i32 = arith.constant 0 : i32
    %c0_i32_0 = arith.constant 0 : i32
    %c0_i32_1 = arith.constant 0 : i32
    return %c0_i32, %c0_i32_0 : i32, i32
  }
  func.func @transform_4(%arg0: i32) -> (i32, i32) {
    %c0_i32 = arith.constant 0 : i32
    %c0_i32_0 = arith.constant 0 : i32
    %c0_i32_1 = arith.constant 0 : i32
    return %c0_i32, %c0_i32_0 : i32, i32
  }
  func.func @transform_5(%arg0: i32) -> (i32, i32, i32) {
    %c0_i32 = arith.constant 0 : i32
    %c0_i32_0 = arith.constant 0 : i32
    %c0_i32_1 = arith.constant 0 : i32
    return %arg0, %c0_i32, %c0_i32_0 : i32, i32, i32
  }
}

</mosaic_0001>

<llo_original>
// kernel: tpu_custom_call.1
$region0: #{tpu_custom_call.1}
  #allocation0 [shape = 'u32[]', space=smem, size = 0x4, offset = 0x4, fixed_abs, tag = 'smem constant byte address 0x4 - core index']
  #allocation1 [shape = 'u32[72,128]{1,0:T(1,128)}', space=vmem, size = 0x9000, scoped, tag = 'internal scratch']
  #allocation2 [shape = 'f32[1,1]{1,0:T(1,128)S(6)}', space=smem, size = 0x200, scoped, tag = 'scoped memory for tpu_custom_call.1']
  %s0 = inlined_call_operand.vmem [shape: f32[8,32], index: 0, kind: input, shape index: {}]
  %s1 = inlined_call_operand.vmem [shape: f32[32,10], index: 1, kind: input, shape index: {}]
  %s2 = inlined_call_operand.vmem [shape: f32[1,10], index: 2, kind: input, shape index: {}]
  %s3 = inlined_call_operand.vmem [shape: f32[1,10], index: 3, kind: input, shape index: {}]
  %s4 = inlined_call_operand.<no memory space> [shape: f32[1,1], index: 4, kind: input, shape index: {}]
  %s5 = inlined_call_operand.hbm [shape: f32[1,1,8], index: 5, kind: output, shape index: {}]
  %s6 = sld [smem:[#allocation0]]
  $region30: #{tpu_custom_call.1} parent=0
    _
  %s8 = ssub.s32 1, %s6
  %s9 = scalar_select 0, %s8, %s6
  %10 = sst [smem:[#allocation2]] %s4
  $region1: #{tpu_custom_call.1} parent=0
    #allocation3 [shape = 'u8[512]{0}', space=vmem, size = 0x400, scoped, tag = 'output window, operand 0, single buffered']
    #allocation4 [shape = 's32[1]{0}', space=sflag, size = 0x4, scoped, tag = 'scoped memory for tpu_custom_call.1']
    %11 = vsyncpa [#allocation4], 0
    // Predicated region
    $region2: #{tpu_custom_call.1} parent=1 // pred_check
      _
    $region3: #{tpu_custom_call.1} parent=1 // pred_check_branch
      %13 = sbr.rel (0) target = $region5
    $region4: #{tpu_custom_call.1} parent=1 // pred_region
      _
    $region5: #{tpu_custom_call.1} parent=1 // pred_fallthru
      _
    // Predicated region
    $region6: #{tpu_custom_call.1} parent=1 // pred_check
      _
    $region7: #{tpu_custom_call.1} parent=1 // pred_check_branch
      %15 = sbr.rel (0) target = $region9
    $region8: #{tpu_custom_call.1} parent=1 // pred_region
      _
    $region9: #{tpu_custom_call.1} parent=1 // pred_fallthru
      _
    // Predicated region
    $region10: #{tpu_custom_call.1} parent=1 // pred_check
      _
    $region11: #{tpu_custom_call.1} parent=1 // pred_check_branch
      %17 = sbr.rel (0) target = $region13
    $region12: #{tpu_custom_call.1} parent=1 // pred_region
      _
    $region13: #{tpu_custom_call.1} parent=1 // pred_fallthru
      _
    // Predicated region
    $region14: #{tpu_custom_call.1} parent=1 // pred_check
      _
    $region15: #{tpu_custom_call.1} parent=1 // pred_check_branch
      %19 = sbr.rel (0) target = $region17
    $region16: #{tpu_custom_call.1} parent=1 // pred_region
      _
    $region17: #{tpu_custom_call.1} parent=1 // pred_fallthru
      _
    // Predicated region
    $region18: #{tpu_custom_call.1} parent=1 // pred_check
      _
    $region19: #{tpu_custom_call.1} parent=1 // pred_check_branch
      %21 = sbr.rel (0) target = $region21
    $region20: #{tpu_custom_call.1} parent=1 // pred_region
      _
    $region21: #{tpu_custom_call.1} parent=1 // pred_fallthru
      _
    %v22 = vld [vmem:[%s1] sm:$0xff]
    %v23 = vld [vmem:[%s1 + $0x8] sm:$0xff]
    %v24 = vld [vmem:[%s1 + $0x10] sm:$0xff]
    %v25 = vld [vmem:[%s1 + $0x18] sm:$0xff]
    %v26 = vld [vmem:[%s2] sm:$0x1]
    %v27 = vld [vmem:[%s3] sm:$0x1]
    %s28 = sld [smem:[#allocation2]]
    %v29 = vld [vmem:[%s0] sm:$0xff]
    %v31 = vperm.slane %v26, 0
    %vm33 = vcmask 261120
    %v35 = vsel %vm33, %v29, 0
    %37 = vmatpush.msra.mxu0 0.0
    %38 = vmatpush.msra.mxu0 0.0
    %39 = vmatpush.msra.mxu0 0.0
    %40 = vmatpush.msra.mxu0 0.0
    %41 = vmatpush.msra.mxu0 0.0
    %42 = vmatpush.msra.mxu0 0.0
    %43 = vmatpush.msra.mxu0 0.0
    %44 = vmatpush.msra.mxu0 0.0
    %45 = vmatpush.msra.mxu0 0.0
    %46 = vmatpush.msra.mxu0 0.0
    %47 = vmatpush.msra.mxu0 0.0
    %48 = vmatpush.msra.mxu0 0.0
    %49 = vmatpush.msra.mxu0 %v25
    %50 = vmatpush.msra.mxu0 %v24
    %51 = vmatpush.msra.mxu0 %v23
    %52 = vmatpush.msra.mxu0 %v22
    %53 = vmatmul.f32.gmra.mxu0 %v35
    %v54 = vpop.f32.mrf.mxu0
    %v55 = vadd.f32 %v31, %v54
    %56 = vdwg.mxu0
    %v57 = vmax.f32 %v55, 0.0
    %v59 = vperm.slane %v27, 0
    %v61 = vmul.f32 %v57, %v59
    %vm62 = vcmask 80896
    %v63 = vsel %vm62, %v61, 0.0
    %64 = vadd.xlane.f32.xlu0 %v63
    %v65 = vpop.xlane.xlu0 %64
    %v66 = vstv %s28
    %v67 = vadd.f32 %v65, %v66
    %v69 = vlaneseq
    %v70 = vand.u32 %v69, 127
    %v71 = vperm.slane %v67, %v70
    %vm73 = vcmask 57344
    %74 = vst.msk [vmem:[#allocation3] sm:$0x1] %vm73, %v71
    // Predicated region
    $region22: #{tpu_custom_call.1} parent=1 // pred_check
      _
    $region23: #{tpu_custom_call.1} parent=1 // pred_check_branch
      %76 = sbr.rel (0) target = $region25
    $region24: #{tpu_custom_call.1} parent=1 // pred_region
      %78 = vsyncadd [#allocation4], 0
      %s80 = sshll.u32 [#allocation3], 4
      %s81 = int_to_ptr.vmem [resolvable:$true] %s80
      %s82 = sshll.u32 %s5, 4
      %s83 = int_to_ptr.hbm [resolvable:$true] %s82
      %85 = dma.vmem_to_hbm [thread:$0]  %s81, 16, %s83, [#allocation4]
    $region25: #{tpu_custom_call.1} parent=1 // pred_fallthru
      _
    // Predicated region
    $region26: #{tpu_custom_call.1} parent=1 // pred_check
      _
    $region27: #{tpu_custom_call.1} parent=1 // pred_check_branch
      %87 = sbr.rel (0) target = $region29
    $region28: #{tpu_custom_call.1} parent=1 // pred_region
      %89 = dma.done [#allocation4], 16
    $region29: #{tpu_custom_call.1} parent=1 // pred_fallthru
      _
    %90 = vsyncpa [#allocation4], 1

</llo_original>
